<compile_context>
chip_gen: v7x
topology: tpu7x:2x2x1
jax: 0.10.0
libtpu: 0.0.40
codegen_flags: <defaults>
</compile_context>

<pallas_src>
import functools

import jax
import jax.numpy as jnp
from jax.experimental import pallas as pl
from jax.experimental.pallas import tpu as pltpu


def _round_up(n, m):
    return ((n + m - 1) // m) * m


def _policy_kernel(x_ref, w1t_ref, b1_ref, wht_ref, bh_ref, out_ref, *,
                   action_dim, fc1_on_vpu):
    """One batch tile; everything is (feature, batch) with batch on lanes."""
    x = x_ref[...]                                    # (state_dim, tm)

    if fc1_on_vpu:
        # K = state_dim is tiny: unrolled broadcast multiply-adds on the VPU beat
        # an MXU push + result-FIFO pop for a 4-deep contraction.
        w1t = w1t_ref[...]                            # (hidden, state_dim)
        h = b1_ref[...] + w1t[:, 0:1] * x[0:1, :]     # (hidden, tm)
        for k in range(1, x.shape[0]):
            h = h + w1t[:, k:k + 1] * x[k:k + 1, :]
    else:
        h = jnp.dot(w1t_ref[...], x,
                    preferred_element_type=jnp.float32) + b1_ref[...]
    h = jnp.maximum(h, 0.0)                           # relu, (hidden, tm)

    # Fused heads on the MXU: (head_rows, hidden) @ (hidden, tm) -> (head_rows, tm).
    z = jnp.dot(wht_ref[...], h,
                preferred_element_type=jnp.float32) + bh_ref[...]

    # Per-sublane activation select on the compact slab only:
    #   rows [0, action_dim)            -> 2 * tanh         (mu head)
    #   rows [action_dim, 2*action_dim) -> stable softplus  (std head)
    #   pad rows                        -> sliced off in the wrapper
    row = jax.lax.broadcasted_iota(jnp.int32, z.shape, 0)
    mu_branch = 2.0 * jnp.tanh(z)
    std_branch = jnp.maximum(z, 0.0) + jnp.log1p(jnp.exp(-jnp.abs(z)))
    out_ref[...] = jnp.where(row < action_dim, mu_branch, std_branch)


def prepare_policy_params(w1, b1, wmu, bmu, wstd, bstd):
    """Call-once weight prep (transpose / fuse heads / sublane-pad), hoisted out
    of the per-step hot path."""
    state_dim, hidden = w1.shape
    action_dim = wmu.shape[1]
    head_rows = _round_up(2 * action_dim, 8)

    w1t = jnp.asarray(w1, jnp.float32).T                           # (hidden, state_dim)
    b1c = jnp.reshape(jnp.asarray(b1, jnp.float32), (hidden, 1))   # (hidden, 1)

    wht = jnp.concatenate([jnp.asarray(wmu, jnp.float32).T,
                           jnp.asarray(wstd, jnp.float32).T], axis=0)   # (2A, hidden)
    bh = jnp.concatenate(
        [jnp.reshape(jnp.asarray(bmu, jnp.float32), (-1, 1)),
         jnp.reshape(jnp.asarray(bstd, jnp.float32), (-1, 1))], axis=0)  # (2A, 1)
    pad = head_rows - 2 * action_dim
    if pad:
        wht = jnp.pad(wht, ((0, pad), (0, 0)))
        bh = jnp.pad(bh, ((0, pad), (0, 0)))
    return (w1t, b1c, wht, bh)


def policy_apply(x, params, *, action_dim, block_batch=4096):
    """Hot-path forward: x (batch, state_dim) -> (mu, std), each (batch, action_dim)."""
    w1t, b1c, wht, bh = params
    hidden, state_dim = w1t.shape
    head_rows = wht.shape[0]
    batch = x.shape[0]

    # Batch on lanes: pad to a multiple of the tile (tile is a multiple of 128).
    tm = min(_round_up(block_batch, 128), _round_up(batch, 128))
    batch_pad = _round_up(batch, tm)
    xt = jnp.asarray(x, jnp.float32).T                             # (state_dim, batch)
    if batch_pad > batch:
        xt = jnp.pad(xt, ((0, 0), (0, batch_pad - batch)))
    grid = (batch_pad // tm,)

    kernel = functools.partial(_policy_kernel, action_dim=action_dim,
                               fc1_on_vpu=(state_dim <= 16))

    cost = pl.CostEstimate(
        flops=2 * batch_pad * (state_dim * hidden + hidden * head_rows),
        transcendentals=3 * batch_pad * head_rows,        # tanh + exp + log1p
        bytes_accessed=4 * (state_dim * batch_pad + hidden * state_dim + hidden
                            + head_rows * hidden + head_rows
                            + head_rows * batch_pad),
    )

    out = pl.pallas_call(
        kernel,
        out_shape=jax.ShapeDtypeStruct((head_rows, batch_pad), jnp.float32),
        grid_spec=pltpu.PrefetchScalarGridSpec(
            num_scalar_prefetch=0,
            grid=grid,
            in_specs=[
                pl.BlockSpec((state_dim, tm), lambda i: (0, i)),        # x^T tile
                pl.BlockSpec((hidden, state_dim), lambda i: (0, 0)),    # W1^T (resident)
                pl.BlockSpec((hidden, 1), lambda i: (0, 0)),            # b1   (resident)
                pl.BlockSpec((head_rows, hidden), lambda i: (0, 0)),    # [Wmu|Wstd]^T
                pl.BlockSpec((head_rows, 1), lambda i: (0, 0)),         # [bmu|bstd]
            ],
            out_specs=pl.BlockSpec((head_rows, tm), lambda i: (0, i)),  # compact slab
        ),
        # TODO(synk): on v7x verify the 1-D "parallel" axis shards across both
        # TensorCores; if not, switch this axis to pltpu.CORE_PARALLEL.
        compiler_params=pltpu.CompilerParams(dimension_semantics=("parallel",)),
        cost_estimate=cost,
    )(xt, w1t, b1c, wht, bh)

    mu = out[:action_dim, :batch].T                                 # (batch, action_dim)
    std = out[action_dim:2 * action_dim, :batch].T
    return mu, std


def policy_net_continuous(x, w1, b1, wmu, bmu, wstd, bstd, *, block_batch=4096):
    """Convenience one-shot path (prep + apply)."""
    params = prepare_policy_params(w1, b1, wmu, bmu, wstd, bstd)
    return policy_apply(x, params, action_dim=wmu.shape[1], block_batch=block_batch)


def _init_linear(key, fan_in, fan_out):
    # PyTorch nn.Linear default init: U(-1/sqrt(fan_in), 1/sqrt(fan_in))
    kw, kb = jax.random.split(key)
    bound = 1.0 / jnp.sqrt(jnp.float32(fan_in))
    w = jax.random.uniform(kw, (fan_in, fan_out), jnp.float32, -bound, bound)
    b = jax.random.uniform(kb, (fan_out,), jnp.float32, -bound, bound)
    return w, b


def _reference(x, w1, b1, wmu, bmu, wstd, bstd):
    h = jax.nn.relu(x @ w1 + b1)
    mu = 2.0 * jnp.tanh(h @ wmu + bmu)
    std = jax.nn.softplus(h @ wstd + bstd)
    return mu, std


if __name__ == "__main__":
    state_dim = 4
    hidden_dim = 128
    action_dim = 2
    batch = 8

    key = jax.random.PRNGKey(0)
    kx, k1, k2, k3 = jax.random.split(key, 4)

    x = jax.random.normal(kx, (batch, state_dim), jnp.float32)
    w1, b1 = _init_linear(k1, state_dim, hidden_dim)
    wmu, bmu = _init_linear(k2, hidden_dim, action_dim)
    wstd, bstd = _init_linear(k3, hidden_dim, action_dim)

    # Hot-path style: prep weights once, jit the per-step apply.
    params = prepare_policy_params(w1, b1, wmu, bmu, wstd, bstd)
    fwd = jax.jit(functools.partial(policy_apply, action_dim=action_dim))
    mu, std = fwd(x, params)
    jax.block_until_ready((mu, std))

    mu_ref, std_ref = _reference(x, w1, b1, wmu, bmu, wstd, bstd)
    assert mu.shape == (batch, action_dim) and std.shape == (batch, action_dim)
    assert jnp.allclose(mu, mu_ref, atol=1e-5, rtol=1e-5)
    assert jnp.allclose(std, std_ref, atol=1e-5, rtol=1e-5)

    print("KERNEL_OK")
</pallas_src>

<mosaic_0001>
module attributes {stable_mosaic.version = 11 : i64} {
  func.func @_policy_kernel(%arg0: i32, %arg1: memref<4x128xf32, #tpu.memory_space<vmem>>, %arg2: memref<128x4xf32, #tpu.memory_space<vmem>>, %arg3: memref<128x1xf32, #tpu.memory_space<vmem>>, %arg4: memref<8x128xf32, #tpu.memory_space<vmem>>, %arg5: memref<8x1xf32, #tpu.memory_space<vmem>>, %arg6: memref<8x128xf32, #tpu.memory_space<vmem>>) attributes {dimension_semantics = [#tpu.dimension_semantics<parallel>], iteration_bounds = array<i64: 1>, scalar_prefetch = 0 : i64, scratch_operands = 0 : i64, tpu.core_type = #tpu.core_type<tc>, window_params = [{transform_indices = @transform_0, window_bounds = array<i64: 4, 128>}, {pipeline_mode = #tpu.pipeline_mode<synchronous>, transform_indices = @transform_1, window_bounds = array<i64: 128, 4>}, {pipeline_mode = #tpu.pipeline_mode<synchronous>, transform_indices = @transform_2, window_bounds = array<i64: 128, 1>}, {pipeline_mode = #tpu.pipeline_mode<synchronous>, transform_indices = @transform_3, window_bounds = array<i64: 8, 128>}, {pipeline_mode = #tpu.pipeline_mode<synchronous>, transform_indices = @transform_4, window_bounds = array<i64: 8, 1>}, {transform_indices = @transform_5, window_bounds = array<i64: 8, 128>}]} {
    %c0 = arith.constant 0 : index
    %c0_0 = arith.constant 0 : index
    %0 = vector.load %arg1[%c0, %c0_0] : memref<4x128xf32, #tpu.memory_space<vmem>>, vector<4x128xf32>
    %c0_1 = arith.constant 0 : index
    %c0_2 = arith.constant 0 : index
    %1 = vector.load %arg2[%c0_1, %c0_2] : memref<128x4xf32, #tpu.memory_space<vmem>>, vector<128x4xf32>
    %c0_3 = arith.constant 0 : index
    %c0_4 = arith.constant 0 : index
    %2 = vector.load %arg3[%c0_3, %c0_4] : memref<128x1xf32, #tpu.memory_space<vmem>>, vector<128x1xf32>
    %3 = vector.extract_strided_slice %1 {offsets = [0, 0], sizes = [128, 1], strides = [1, 1]} : vector<128x4xf32> to vector<128x1xf32>
    %4 = vector.extract_strided_slice %0 {offsets = [0, 0], sizes = [1, 128], strides = [1, 1]} : vector<4x128xf32> to vector<1x128xf32>
    %5 = vector.broadcast %3 : vector<128x1xf32> to vector<128x128xf32>
    %6 = vector.broadcast %4 : vector<1x128xf32> to vector<128x128xf32>
    %7 = arith.mulf %5, %6 : vector<128x128xf32>
    %8 = vector.broadcast %2 : vector<128x1xf32> to vector<128x128xf32>
    %9 = arith.addf %8, %7 : vector<128x128xf32>
    %10 = vector.extract_strided_slice %1 {offsets = [0, 1], sizes = [128, 1], strides = [1, 1]} : vector<128x4xf32> to vector<128x1xf32>
    %11 = vector.extract_strided_slice %0 {offsets = [1, 0], sizes = [1, 128], strides = [1, 1]} : vector<4x128xf32> to vector<1x128xf32>
    %12 = vector.broadcast %10 : vector<128x1xf32> to vector<128x128xf32>
    %13 = vector.broadcast %11 : vector<1x128xf32> to vector<128x128xf32>
    %14 = arith.mulf %12, %13 : vector<128x128xf32>
    %15 = arith.addf %9, %14 : vector<128x128xf32>
    %16 = vector.extract_strided_slice %1 {offsets = [0, 2], sizes = [128, 1], strides = [1, 1]} : vector<128x4xf32> to vector<128x1xf32>
    %17 = vector.extract_strided_slice %0 {offsets = [2, 0], sizes = [1, 128], strides = [1, 1]} : vector<4x128xf32> to vector<1x128xf32>
    %18 = vector.broadcast %16 : vector<128x1xf32> to vector<128x128xf32>
    %19 = vector.broadcast %17 : vector<1x128xf32> to vector<128x128xf32>
    %20 = arith.mulf %18, %19 : vector<128x128xf32>
    %21 = arith.addf %15, %20 : vector<128x128xf32>
    %22 = vector.extract_strided_slice %1 {offsets = [0, 3], sizes = [128, 1], strides = [1, 1]} : vector<128x4xf32> to vector<128x1xf32>
    %23 = vector.extract_strided_slice %0 {offsets = [3, 0], sizes = [1, 128], strides = [1, 1]} : vector<4x128xf32> to vector<1x128xf32>
    %24 = vector.broadcast %22 : vector<128x1xf32> to vector<128x128xf32>
    %25 = vector.broadcast %23 : vector<1x128xf32> to vector<128x128xf32>
    %26 = arith.mulf %24, %25 : vector<128x128xf32>
    %27 = arith.addf %21, %26 : vector<128x128xf32>
    %cst = arith.constant 0.000000e+00 : f32
    %28 = vector.broadcast %cst : f32 to vector<128x128xf32>
    %29 = arith.maximumf %27, %28 : vector<128x128xf32>
    %c0_5 = arith.constant 0 : index
    %c0_6 = arith.constant 0 : index
    %30 = vector.load %arg4[%c0_5, %c0_6] : memref<8x128xf32, #tpu.memory_space<vmem>>, vector<8x128xf32>
    %cst_7 = arith.constant dense<0.000000e+00> : vector<8x128xf32>
    %31 = tpu.matmul %30, %29, %cst_7 {dimension_numbers = #tpu.dot_dimension_numbers<[1], [0], [0], [1], [0, 0, 1, 1], [], []>} : vector<8x128xf32>, vector<128x128xf32>, vector<8x128xf32> -> vector<8x128xf32>
    %c0_8 = arith.constant 0 : index
    %c0_9 = arith.constant 0 : index
    %32 = vector.load %arg5[%c0_8, %c0_9] : memref<8x1xf32, #tpu.memory_space<vmem>>, vector<8x1xf32>
    %33 = vector.broadcast %32 : vector<8x1xf32> to vector<8x128xf32>
    %34 = arith.addf %31, %33 : vector<8x128xf32>
    %35 = tpu.iota {dimensions = array<i32: 0>} : vector<8x128xi32>
    %36 = math.tanh %34 : vector<8x128xf32>
    %cst_10 = arith.constant 2.000000e+00 : f32
    %37 = vector.broadcast %cst_10 : f32 to vector<8x128xf32>
    %38 = arith.mulf %37, %36 : vector<8x128xf32>
    %cst_11 = arith.constant 0.000000e+00 : f32
    %39 = vector.broadcast %cst_11 : f32 to vector<8x128xf32>
    %40 = arith.maximumf %34, %39 : vector<8x128xf32>
    %41 = math.absf %34 : vector<8x128xf32>
    %cst_12 = arith.constant 0.000000e+00 : f32
    %42 = vector.broadcast %cst_12 : f32 to vector<8x128xf32>
    %43 = arith.subf %42, %41 : vector<8x128xf32>
    %44 = math.exp %43 : vector<8x128xf32>
    %45 = math.log1p %44 : vector<8x128xf32>
    %46 = arith.addf %40, %45 : vector<8x128xf32>
    %c2_i32 = arith.constant 2 : i32
    %47 = vector.broadcast %c2_i32 : i32 to vector<8x128xi32>
    %48 = arith.cmpi slt, %35, %47 : vector<8x128xi32>
    %49 = arith.select %48, %38, %46 : vector<8x128xi1>, vector<8x128xf32>
    %c0_13 = arith.constant 0 : index
    %c0_14 = arith.constant 0 : index
    %50 = vector.load %arg6[%c0_13, %c0_14] : memref<8x128xf32, #tpu.memory_space<vmem>>, vector<8x128xf32>
    tpu.vector_store %arg6[%c0_13, %c0_14], %49 {strides = array<i32>} : memref<8x128xf32, #tpu.memory_space<vmem>>, vector<8x128xf32>,
    return
  }
  func.func @transform_0(%arg0: i32) -> (i32, i32) {
    %c0_i32 = arith.constant 0 : i32
    %c0_i32_0 = arith.constant 0 : i32
    return %c0_i32, %arg0 : i32, i32
  }
  func.func @transform_1(%arg0: i32) -> (i32, i32) {
    %c0_i32 = arith.constant 0 : i32
    %c0_i32_0 = arith.constant 0 : i32
    %c0_i32_1 = arith.constant 0 : i32
    return %c0_i32, %c0_i32_0 : i32, i32
  }
  func.func @transform_2(%arg0: i32) -> (i32, i32) {
    %c0_i32 = arith.constant 0 : i32
    %c0_i32_0 = arith.constant 0 : i32
    %c0_i32_1 = arith.constant 0 : i32
    return %c0_i32, %c0_i32_0 : i32, i32
  }
  func.func @transform_3(%arg0: i32) -> (i32, i32) {
    %c0_i32 = arith.constant 0 : i32
    %c0_i32_0 = arith.constant 0 : i32
    %c0_i32_1 = arith.constant 0 : i32
    return %c0_i32, %c0_i32_0 : i32, i32
  }
  func.func @transform_4(%arg0: i32) -> (i32, i32) {
    %c0_i32 = arith.constant 0 : i32
    %c0_i32_0 = arith.constant 0 : i32
    %c0_i32_1 = arith.constant 0 : i32
    return %c0_i32, %c0_i32_0 : i32, i32
  }
  func.func @transform_5(%arg0: i32) -> (i32, i32) {
    %c0_i32 = arith.constant 0 : i32
    %c0_i32_0 = arith.constant 0 : i32
    return %c0_i32, %arg0 : i32, i32
  }
}

</mosaic_0001>

<llo_original>
// kernel: policy_apply.1
$region0: #{policy_apply.1}
  #allocation0 [shape = 'u32[]', space=smem, size = 0x4, offset = 0x4, fixed_abs, tag = 'smem constant byte address 0x4 - core index']
  #allocation1 [shape = 'u32[144,128]{1,0:T(1,128)}', space=vmem, size = 0x12000, scoped, tag = 'internal scratch']
  %s0 = inlined_call_operand.vmem [shape: f32[4,128], index: 0, kind: input, shape index: {}]
  %s1 = inlined_call_operand.vmem [shape: f32[128,4], index: 1, kind: input, shape index: {}]
  %s2 = inlined_call_operand.vmem [shape: f32[128,1], index: 2, kind: input, shape index: {}]
  %s3 = inlined_call_operand.vmem [shape: f32[8,128], index: 3, kind: input, shape index: {}]
  %s4 = inlined_call_operand.vmem [shape: f32[8,1], index: 4, kind: input, shape index: {}]
  %s5 = inlined_call_operand.vmem [shape: f32[8,128], index: 5, kind: output, shape index: {}]
  %s6 = sld [smem:[#allocation0]]
  $region30: #{policy_apply.1} parent=0
    _
  %s8 = ssub.s32 1, %s6
  %s9 = scalar_select 0, %s8, %s6
  // Predicated region
  $region2: #{policy_apply.1} parent=0 // pred_check
    _
  $region3: #{policy_apply.1} parent=0 // pred_check_branch
    %11 = sbr.rel (0) target = $region5
  $region4: #{policy_apply.1} parent=0 // pred_region
    _
  $region5: #{policy_apply.1} parent=0 // pred_fallthru
    _
  // Predicated region
  $region6: #{policy_apply.1} parent=0 // pred_check
    _
  $region7: #{policy_apply.1} parent=0 // pred_check_branch
    %13 = sbr.rel (0) target = $region9
  $region8: #{policy_apply.1} parent=0 // pred_region
    _
  $region9: #{policy_apply.1} parent=0 // pred_fallthru
    _
  // Predicated region
  $region10: #{policy_apply.1} parent=0 // pred_check
    _
  $region11: #{policy_apply.1} parent=0 // pred_check_branch
    %15 = sbr.rel (0) target = $region13
  $region12: #{policy_apply.1} parent=0 // pred_region
    _
  $region13: #{policy_apply.1} parent=0 // pred_fallthru
    _
  // Predicated region
  $region14: #{policy_apply.1} parent=0 // pred_check
    _
  $region15: #{policy_apply.1} parent=0 // pred_check_branch
    %17 = sbr.rel (0) target = $region17
  $region16: #{policy_apply.1} parent=0 // pred_region
    _
  $region17: #{policy_apply.1} parent=0 // pred_fallthru
    _
  // Predicated region
  $region18: #{policy_apply.1} parent=0 // pred_check
    _
  $region19: #{policy_apply.1} parent=0 // pred_check_branch
    %19 = sbr.rel (0) target = $region21
  $region20: #{policy_apply.1} parent=0 // pred_region
    _
  $region21: #{policy_apply.1} parent=0 // pred_fallthru
    _
  %v20 = vld [vmem:[%s0] sm:$0xf]
  %v21 = vld [vmem:[%s1] sm:$0xff]
  %v22 = vld [vmem:[%s1 + $0x8] sm:$0xff]
  %v23 = vld [vmem:[%s1 + $0x10] sm:$0xff]
  %v24 = vld [vmem:[%s1 + $0x18] sm:$0xff]
  %v25 = vld [vmem:[%s1 + $0x20] sm:$0xff]
  %v26 = vld [vmem:[%s1 + $0x28] sm:$0xff]
  %v27 = vld [vmem:[%s1 + $0x30] sm:$0xff]
  %v28 = vld [vmem:[%s1 + $0x38] sm:$0xff]
  %v29 = vld [vmem:[%s1 + $0x40] sm:$0xff]
  %v30 = vld [vmem:[%s1 + $0x48] sm:$0xff]
  %v31 = vld [vmem:[%s1 + $0x50] sm:$0xff]
  %v32 = vld [vmem:[%s1 + $0x58] sm:$0xff]
  %v33 = vld [vmem:[%s1 + $0x60] sm:$0xff]
  %v34 = vld [vmem:[%s1 + $0x68] sm:$0xff]
  %v35 = vld [vmem:[%s1 + $0x70] sm:$0xff]
  %v36 = vld [vmem:[%s1 + $0x78] sm:$0xff]
  %v37 = vld [vmem:[%s2] sm:$0xff]
  %v38 = vld [vmem:[%s2 + $0x8] sm:$0xff]
  %v39 = vld [vmem:[%s2 + $0x10] sm:$0xff]
  %v40 = vld [vmem:[%s2 + $0x18] sm:$0xff]
  %v41 = vld [vmem:[%s2 + $0x20] sm:$0xff]
  %v42 = vld [vmem:[%s2 + $0x28] sm:$0xff]
  %v43 = vld [vmem:[%s2 + $0x30] sm:$0xff]
  %v44 = vld [vmem:[%s2 + $0x38] sm:$0xff]
  %v45 = vld [vmem:[%s2 + $0x40] sm:$0xff]
  %v46 = vld [vmem:[%s2 + $0x48] sm:$0xff]
  %v47 = vld [vmem:[%s2 + $0x50] sm:$0xff]
  %v48 = vld [vmem:[%s2 + $0x58] sm:$0xff]
  %v49 = vld [vmem:[%s2 + $0x60] sm:$0xff]
  %v50 = vld [vmem:[%s2 + $0x68] sm:$0xff]
  %v51 = vld [vmem:[%s2 + $0x70] sm:$0xff]
  %v52 = vld [vmem:[%s2 + $0x78] sm:$0xff]
  %54 = vset.pattern.permute.xlu0 0
  %55 = vperm.xlu0 %54, %v21
  %v56 = vpop.permute.xlu0 %55
  %59 = vset.pattern.permute.xlu0 0
  %60 = vperm.xlu0 %59, %v22
  %v61 = vpop.permute.xlu0 %60
  %64 = vset.pattern.permute.xlu0 0
  %65 = vperm.xlu0 %64, %v23
  %v66 = vpop.permute.xlu0 %65
  %69 = vset.pattern.permute.xlu0 0
  %70 = vperm.xlu0 %69, %v24
  %v71 = vpop.permute.xlu0 %70
  %74 = vset.pattern.permute.xlu0 0
  %75 = vperm.xlu0 %74, %v25
  %v76 = vpop.permute.xlu0 %75
  %79 = vset.pattern.permute.xlu0 0
  %80 = vperm.xlu0 %79, %v26
  %v81 = vpop.permute.xlu0 %80
  %84 = vset.pattern.permute.xlu0 0
  %85 = vperm.xlu0 %84, %v27
  %v86 = vpop.permute.xlu0 %85
  %89 = vset.pattern.permute.xlu0 0
  %90 = vperm.xlu0 %89, %v28
  %v91 = vpop.permute.xlu0 %90
  %94 = vset.pattern.permute.xlu0 0
  %95 = vperm.xlu0 %94, %v29
  %v96 = vpop.permute.xlu0 %95
  %99 = vset.pattern.permute.xlu0 0
  %100 = vperm.xlu0 %99, %v30
  %v101 = vpop.permute.xlu0 %100
  %104 = vset.pattern.permute.xlu0 0
  %105 = vperm.xlu0 %104, %v31
  %v106 = vpop.permute.xlu0 %105
  %109 = vset.pattern.permute.xlu0 0
  %110 = vperm.xlu0 %109, %v32
  %v111 = vpop.permute.xlu0 %110
  %114 = vset.pattern.permute.xlu0 0
  %115 = vperm.xlu0 %114, %v33
  %v116 = vpop.permute.xlu0 %115
  %119 = vset.pattern.permute.xlu0 0
  %120 = vperm.xlu0 %119, %v34
  %v121 = vpop.permute.xlu0 %120
  %124 = vset.pattern.permute.xlu0 0
  %125 = vperm.xlu0 %124, %v35
  %v126 = vpop.permute.xlu0 %125
  %129 = vset.pattern.permute.xlu0 0
  %130 = vperm.xlu0 %129, %v36
  %v131 = vpop.permute.xlu0 %130
  %v133 = vlaneseq
  %v134 = vshrl.u32 %v133, 7
  %v135 = vsub.s32 0, %v134
  %v136 = vrot.slane %v20, %v135
  %v137 = vmul.f32 %v56, %v136
  %v138 = vmul.f32 %v61, %v136
  %v139 = vmul.f32 %v66, %v136
  %v140 = vmul.f32 %v71, %v136
  %v141 = vmul.f32 %v76, %v136
  %v142 = vmul.f32 %v81, %v136
  %v143 = vmul.f32 %v86, %v136
  %v144 = vmul.f32 %v91, %v136
  %v145 = vmul.f32 %v96, %v136
  %v146 = vmul.f32 %v101, %v136
  %v147 = vmul.f32 %v106, %v136
  %v148 = vmul.f32 %v111, %v136
  %v149 = vmul.f32 %v116, %v136
  %v150 = vmul.f32 %v121, %v136
  %v151 = vmul.f32 %v126, %v136
  %v152 = vmul.f32 %v131, %v136
  %154 = vset.pattern.permute.xlu0 0
  %155 = vperm.xlu0 %154, %v37
  %v156 = vpop.permute.xlu0 %155
  %159 = vset.pattern.permute.xlu0 0
  %160 = vperm.xlu0 %159, %v38
  %v161 = vpop.permute.xlu0 %160
  %164 = vset.pattern.permute.xlu0 0
  %165 = vperm.xlu0 %164, %v39
  %v166 = vpop.permute.xlu0 %165
  %169 = vset.pattern.permute.xlu0 0
  %170 = vperm.xlu0 %169, %v40
  %v171 = vpop.permute.xlu0 %170
  %174 = vset.pattern.permute.xlu0 0
  %175 = vperm.xlu0 %174, %v41
  %v176 = vpop.permute.xlu0 %175
  %179 = vset.pattern.permute.xlu0 0
  %180 = vperm.xlu0 %179, %v42
  %v181 = vpop.permute.xlu0 %180
  %184 = vset.pattern.permute.xlu0 0
  %185 = vperm.xlu0 %184, %v43
  %v186 = vpop.permute.xlu0 %185
  %189 = vset.pattern.permute.xlu0 0
  %190 = vperm.xlu0 %189, %v44
  %v191 = vpop.permute.xlu0 %190
  %194 = vset.pattern.permute.xlu0 0
  %195 = vperm.xlu0 %194, %v45
  %v196 = vpop.permute.xlu0 %195
  %199 = vset.pattern.permute.xlu0 0
  %200 = vperm.xlu0 %199, %v46
  %v201 = vpop.permute.xlu0 %200
  %204 = vset.pattern.permute.xlu0 0
  %205 = vperm.xlu0 %204, %v47
  %v206 = vpop.permute.xlu0 %205
  %209 = vset.pattern.permute.xlu0 0
  %210 = vperm.xlu0 %209, %v48
  %v211 = vpop.permute.xlu0 %210
  %214 = vset.pattern.permute.xlu0 0
  %215 = vperm.xlu0 %214, %v49
  %v216 = vpop.permute.xlu0 %215
  %219 = vset.pattern.permute.xlu0 0
  %220 = vperm.xlu0 %219, %v50
  %v221 = vpop.permute.xlu0 %220
  %224 = vset.pattern.permute.xlu0 0
  %225 = vperm.xlu0 %224, %v51
  %v226 = vpop.permute.xlu0 %225
  %229 = vset.pattern.permute.xlu0 0
  %230 = vperm.xlu0 %229, %v52
  %v231 = vpop.permute.xlu0 %230
  %v233 = vadd.f32 %v156, %v137
  %v234 = vadd.f32 %v161, %v138
  %v235 = vadd.f32 %v166, %v139
  %v236 = vadd.f32 %v171, %v140
  %v237 = vadd.f32 %v176, %v141
  %v238 = vadd.f32 %v181, %v142
  %v239 = vadd.f32 %v186, %v143
  %v240 = vadd.f32 %v191, %v144
  %v241 = vadd.f32 %v196, %v145
  %v242 = vadd.f32 %v201, %v146
  %v243 = vadd.f32 %v206, %v147
  %v244 = vadd.f32 %v211, %v148
  %v245 = vadd.f32 %v216, %v149
  %v246 = vadd.f32 %v221, %v150
  %v247 = vadd.f32 %v226, %v151
  %v248 = vadd.f32 %v231, %v152
  %249 = vset.pattern.permute.xlu0 1
  %250 = vperm.xlu0 %249, %v21
  %v251 = vpop.permute.xlu0 %250
  %253 = vset.pattern.permute.xlu0 1
  %254 = vperm.xlu0 %253, %v22
  %v255 = vpop.permute.xlu0 %254
  %257 = vset.pattern.permute.xlu0 1
  %258 = vperm.xlu0 %257, %v23
  %v259 = vpop.permute.xlu0 %258
  %261 = vset.pattern.permute.xlu0 1
  %262 = vperm.xlu0 %261, %v24
  %v263 = vpop.permute.xlu0 %262
  %265 = vset.pattern.permute.xlu0 1
  %266 = vperm.xlu0 %265, %v25
  %v267 = vpop.permute.xlu0 %266
  %269 = vset.pattern.permute.xlu0 1
  %270 = vperm.xlu0 %269, %v26
  %v271 = vpop.permute.xlu0 %270
  %273 = vset.pattern.permute.xlu0 1
  %274 = vperm.xlu0 %273, %v27
  %v275 = vpop.permute.xlu0 %274
  %277 = vset.pattern.permute.xlu0 1
  %278 = vperm.xlu0 %277, %v28
  %v279 = vpop.permute.xlu0 %278
  %281 = vset.pattern.permute.xlu0 1
  %282 = vperm.xlu0 %281, %v29
  %v283 = vpop.permute.xlu0 %282
  %285 = vset.pattern.permute.xlu0 1
  %286 = vperm.xlu0 %285, %v30
  %v287 = vpop.permute.xlu0 %286
  %289 = vset.pattern.permute.xlu0 1
  %290 = vperm.xlu0 %289, %v31
  %v291 = vpop.permute.xlu0 %290
  %293 = vset.pattern.permute.xlu0 1
  %294 = vperm.xlu0 %293, %v32
  %v295 = vpop.permute.xlu0 %294
  %297 = vset.pattern.permute.xlu0 1
  %298 = vperm.xlu0 %297, %v33
  %v299 = vpop.permute.xlu0 %298
  %301 = vset.pattern.permute.xlu0 1
  %302 = vperm.xlu0 %301, %v34
  %v303 = vpop.permute.xlu0 %302
  %305 = vset.pattern.permute.xlu0 1
  %306 = vperm.xlu0 %305, %v35
  %v307 = vpop.permute.xlu0 %306
  %309 = vset.pattern.permute.xlu0 1
  %310 = vperm.xlu0 %309, %v36
  %v311 = vpop.permute.xlu0 %310
  %v313 = vlaneseq
  %v314 = vshrl.u32 %v313, 7
  %v315 = vsub.s32 1, %v314
  %v316 = vrot.slane %v20, %v315
  %v317 = vmul.f32 %v251, %v316
  %v318 = vmul.f32 %v255, %v316
  %v319 = vmul.f32 %v259, %v316
  %v320 = vmul.f32 %v263, %v316
  %v321 = vmul.f32 %v267, %v316
  %v322 = vmul.f32 %v271, %v316
  %v323 = vmul.f32 %v275, %v316
  %v324 = vmul.f32 %v279, %v316
  %v325 = vmul.f32 %v283, %v316
  %v326 = vmul.f32 %v287, %v316
  %v327 = vmul.f32 %v291, %v316
  %v328 = vmul.f32 %v295, %v316
  %v329 = vmul.f32 %v299, %v316
  %v330 = vmul.f32 %v303, %v316
  %v331 = vmul.f32 %v307, %v316
  %v332 = vmul.f32 %v311, %v316
  %v333 = vadd.f32 %v233, %v317
  %v334 = vadd.f32 %v234, %v318
  %v335 = vadd.f32 %v235, %v319
  %v336 = vadd.f32 %v236, %v320
  %v337 = vadd.f32 %v237, %v321
  %v338 = vadd.f32 %v238, %v322
  %v339 = vadd.f32 %v239, %v323
  %v340 = vadd.f32 %v240, %v324
  %v341 = vadd.f32 %v241, %v325
  %v342 = vadd.f32 %v242, %v326
  %v343 = vadd.f32 %v243, %v327
  %v344 = vadd.f32 %v244, %v328
  %v345 = vadd.f32 %v245, %v329
  %v346 = vadd.f32 %v246, %v330
  %v347 = vadd.f32 %v247, %v331
  %v348 = vadd.f32 %v248, %v332
  %349 = vset.pattern.permute.xlu0 2
  %350 = vperm.xlu0 %349, %v21
  %v351 = vpop.permute.xlu0 %350
  %353 = vset.pattern.permute.xlu0 2
  %354 = vperm.xlu0 %353, %v22
  %v355 = vpop.permute.xlu0 %354
  %357 = vset.pattern.permute.xlu0 2
  %358 = vperm.xlu0 %357, %v23
  %v359 = vpop.permute.xlu0 %358
  %361 = vset.pattern.permute.xlu0 2
  %362 = vperm.xlu0 %361, %v24
  %v363 = vpop.permute.xlu0 %362
  %365 = vset.pattern.permute.xlu0 2
  %366 = vperm.xlu0 %365, %v25
  %v367 = vpop.permute.xlu0 %366
  %369 = vset.pattern.permute.xlu0 2
  %370 = vperm.xlu0 %369, %v26
  %v371 = vpop.permute.xlu0 %370
  %373 = vset.pattern.permute.xlu0 2
  %374 = vperm.xlu0 %373, %v27
  %v375 = vpop.permute.xlu0 %374
  %377 = vset.pattern.permute.xlu0 2
  %378 = vperm.xlu0 %377, %v28
  %v379 = vpop.permute.xlu0 %378
  %381 = vset.pattern.permute.xlu0 2
  %382 = vperm.xlu0 %381, %v29
  %v383 = vpop.permute.xlu0 %382
  %385 = vset.pattern.permute.xlu0 2
  %386 = vperm.xlu0 %385, %v30
  %v387 = vpop.permute.xlu0 %386
  %389 = vset.pattern.permute.xlu0 2
  %390 = vperm.xlu0 %389, %v31
  %v391 = vpop.permute.xlu0 %390
  %393 = vset.pattern.permute.xlu0 2
  %394 = vperm.xlu0 %393, %v32
  %v395 = vpop.permute.xlu0 %394
  %397 = vset.pattern.permute.xlu0 2
  %398 = vperm.xlu0 %397, %v33
  %v399 = vpop.permute.xlu0 %398
  %401 = vset.pattern.permute.xlu0 2
  %402 = vperm.xlu0 %401, %v34
  %v403 = vpop.permute.xlu0 %402
  %405 = vset.pattern.permute.xlu0 2
  %406 = vperm.xlu0 %405, %v35
  %v407 = vpop.permute.xlu0 %406
  %409 = vset.pattern.permute.xlu0 2
  %410 = vperm.xlu0 %409, %v36
  %v411 = vpop.permute.xlu0 %410
  %v413 = vlaneseq
  %v414 = vshrl.u32 %v413, 7
  %v415 = vsub.s32 2, %v414
  %v416 = vrot.slane %v20, %v415
  %v417 = vmul.f32 %v351, %v416
  %v418 = vmul.f32 %v355, %v416
  %v419 = vmul.f32 %v359, %v416
  %v420 = vmul.f32 %v363, %v416
  %v421 = vmul.f32 %v367, %v416
  %v422 = vmul.f32 %v371, %v416
  %v423 = vmul.f32 %v375, %v416
  %v424 = vmul.f32 %v379, %v416
  %v425 = vmul.f32 %v383, %v416
  %v426 = vmul.f32 %v387, %v416
  %v427 = vmul.f32 %v391, %v416
  %v428 = vmul.f32 %v395, %v416
  %v429 = vmul.f32 %v399, %v416
  %v430 = vmul.f32 %v403, %v416
  %v431 = vmul.f32 %v407, %v416
  %v432 = vmul.f32 %v411, %v416
  %v433 = vadd.f32 %v333, %v417
  %v434 = vadd.f32 %v334, %v418
  %v435 = vadd.f32 %v335, %v419
  %v436 = vadd.f32 %v336, %v420
  %v437 = vadd.f32 %v337, %v421
  %v438 = vadd.f32 %v338, %v422
  %v439 = vadd.f32 %v339, %v423
  %v440 = vadd.f32 %v340, %v424
  %v441 = vadd.f32 %v341, %v425
  %v442 = vadd.f32 %v342, %v426
  %v443 = vadd.f32 %v343, %v427
  %v444 = vadd.f32 %v344, %v428
  %v445 = vadd.f32 %v345, %v429
  %v446 = vadd.f32 %v346, %v430
  %v447 = vadd.f32 %v347, %v431
  %v448 = vadd.f32 %v348, %v432
  %449 = vset.pattern.permute.xlu0 3
  %450 = vperm.xlu0 %449, %v21
  %v451 = vpop.permute.xlu0 %450
  %453 = vset.pattern.permute.xlu0 3
  %454 = vperm.xlu0 %453, %v22
  %v455 = vpop.permute.xlu0 %454
  %457 = vset.pattern.permute.xlu0 3
  %458 = vperm.xlu0 %457, %v23
  %v459 = vpop.permute.xlu0 %458
  %461 = vset.pattern.permute.xlu0 3
  %462 = vperm.xlu0 %461, %v24
  %v463 = vpop.permute.xlu0 %462
  %465 = vset.pattern.permute.xlu0 3
  %466 = vperm.xlu0 %465, %v25
  %v467 = vpop.permute.xlu0 %466
  %469 = vset.pattern.permute.xlu0 3
  %470 = vperm.xlu0 %469, %v26
  %v471 = vpop.permute.xlu0 %470
  %473 = vset.pattern.permute.xlu0 3
  %474 = vperm.xlu0 %473, %v27
  %v475 = vpop.permute.xlu0 %474
  %477 = vset.pattern.permute.xlu0 3
  %478 = vperm.xlu0 %477, %v28
  %v479 = vpop.permute.xlu0 %478
  %481 = vset.pattern.permute.xlu0 3
  %482 = vperm.xlu0 %481, %v29
  %v483 = vpop.permute.xlu0 %482
  %485 = vset.pattern.permute.xlu0 3
  %486 = vperm.xlu0 %485, %v30
  %v487 = vpop.permute.xlu0 %486
  %489 = vset.pattern.permute.xlu0 3
  %490 = vperm.xlu0 %489, %v31
  %v491 = vpop.permute.xlu0 %490
  %493 = vset.pattern.permute.xlu0 3
  %494 = vperm.xlu0 %493, %v32
  %v495 = vpop.permute.xlu0 %494
  %497 = vset.pattern.permute.xlu0 3
  %498 = vperm.xlu0 %497, %v33
  %v499 = vpop.permute.xlu0 %498
  %501 = vset.pattern.permute.xlu0 3
  %502 = vperm.xlu0 %501, %v34
  %v503 = vpop.permute.xlu0 %502
  %505 = vset.pattern.permute.xlu0 3
  %506 = vperm.xlu0 %505, %v35
  %v507 = vpop.permute.xlu0 %506
  %509 = vset.pattern.permute.xlu0 3
  %510 = vperm.xlu0 %509, %v36
  %v511 = vpop.permute.xlu0 %510
  %v513 = vlaneseq
  %v514 = vshrl.u32 %v513, 7
  %v515 = vsub.s32 3, %v514
  %v516 = vrot.slane %v20, %v515
  %v517 = vmul.f32 %v451, %v516
  %v518 = vmul.f32 %v455, %v516
  %v519 = vmul.f32 %v459, %v516
  %v520 = vmul.f32 %v463, %v516
  %v521 = vmul.f32 %v467, %v516
  %v522 = vmul.f32 %v471, %v516
  %v523 = vmul.f32 %v475, %v516
  %v524 = vmul.f32 %v479, %v516
  %v525 = vmul.f32 %v483, %v516
  %v526 = vmul.f32 %v487, %v516
  %v527 = vmul.f32 %v491, %v516
  %v528 = vmul.f32 %v495, %v516
  %v529 = vmul.f32 %v499, %v516
  %v530 = vmul.f32 %v503, %v516
  %v531 = vmul.f32 %v507, %v516
  %v532 = vmul.f32 %v511, %v516
  %v533 = vadd.f32 %v433, %v517
  %v534 = vadd.f32 %v434, %v518
  %v535 = vadd.f32 %v435, %v519
  %v536 = vadd.f32 %v436, %v520
  %v537 = vadd.f32 %v437, %v521
  %v538 = vadd.f32 %v438, %v522
  %v539 = vadd.f32 %v439, %v523
  %v540 = vadd.f32 %v440, %v524
  %v541 = vadd.f32 %v441, %v525
  %v542 = vadd.f32 %v442, %v526
  %v543 = vadd.f32 %v443, %v527
  %v544 = vadd.f32 %v444, %v528
  %v545 = vadd.f32 %v445, %v529
  %v546 = vadd.f32 %v446, %v530
  %v547 = vadd.f32 %v447, %v531
  %v548 = vadd.f32 %v448, %v532
  %v549 = vmax.f32 %v533, 0.0
  %v550 = vmax.f32 %v534, 0.0
  %v551 = vmax.f32 %v535, 0.0
  %v552 = vmax.f32 %v536, 0.0
  %v553 = vmax.f32 %v537, 0.0
  %v554 = vmax.f32 %v538, 0.0
  %v555 = vmax.f32 %v539, 0.0
  %v556 = vmax.f32 %v540, 0.0
  %v557 = vmax.f32 %v541, 0.0
  %v558 = vmax.f32 %v542, 0.0
  %v559 = vmax.f32 %v543, 0.0
  %v560 = vmax.f32 %v544, 0.0
  %v561 = vmax.f32 %v545, 0.0
  %v562 = vmax.f32 %v546, 0.0
  %v563 = vmax.f32 %v547, 0.0
  %v564 = vmax.f32 %v548, 0.0
  %v565 = vld [vmem:[%s3] sm:$0xff]
  %v566 = vld [vmem:[%s4] sm:$0xff]
  %568 = vset.pattern.permute.xlu0 0
  %569 = vperm.xlu0 %568, %v566
  %v570 = vpop.permute.xlu0 %569
  %572 = vmatprep.subr.mxu0 0.0
  %573 = vmatpush1.msra.mxu0 %v549
  %574 = vmatprep.subr.mxu0 0.0
  %575 = vmatpush1.msra.mxu0 %v550
  %576 = vmatprep.subr.mxu0 0.0
  %577 = vmatpush1.msra.mxu0 %v551
  %578 = vmatprep.subr.mxu0 0.0
  %579 = vmatpush1.msra.mxu0 %v552
  %580 = vmatprep.subr.mxu0 0.0
  %581 = vmatpush1.msra.mxu0 %v553
  %582 = vmatprep.subr.mxu0 0.0
  %583 = vmatpush1.msra.mxu0 %v554
  %584 = vmatprep.subr.mxu0 0.0
  %585 = vmatpush1.msra.mxu0 %v555
  %586 = vmatprep.subr.mxu0 0.0
  %587 = vmatpush1.msra.mxu0 %v556
  %588 = vmatprep.subr.mxu0 0.0
  %589 = vmatpush1.msra.mxu0 %v557
  %590 = vmatprep.subr.mxu0 0.0
  %591 = vmatpush1.msra.mxu0 %v558
  %592 = vmatprep.subr.mxu0 0.0
  %593 = vmatpush1.msra.mxu0 %v559
  %594 = vmatprep.subr.mxu0 0.0
  %595 = vmatpush1.msra.mxu0 %v560
  %596 = vmatprep.subr.mxu0 0.0
  %597 = vmatpush1.msra.mxu0 %v561
  %598 = vmatprep.subr.mxu0 0.0
  %599 = vmatpush1.msra.mxu0 %v562
  %600 = vmatprep.subr.mxu0 0.0
  %601 = vmatpush1.msra.mxu0 %v563
  %602 = vmatprep.subr.mxu0 0.0
  %603 = vmatpush1.msra.mxu0 %v564
  %604 = vmatprep.subr.mxu0 0.0
  %605 = vmatpush1.msra.mxu0 0.0
  %606 = vmatprep.subr.mxu0 0.0
  %607 = vmatpush1.msra.mxu0 0.0
  %608 = vmatprep.subr.mxu0 0.0
  %609 = vmatpush1.msra.mxu0 0.0
  %610 = vmatprep.subr.mxu0 0.0
  %611 = vmatpush1.msra.mxu0 0.0
  %612 = vmatprep.subr.mxu0 0.0
  %613 = vmatpush1.msra.mxu0 0.0
  %614 = vmatprep.subr.mxu0 0.0
  %615 = vmatpush1.msra.mxu0 0.0
  %616 = vmatprep.subr.mxu0 0.0
  %617 = vmatpush1.msra.mxu0 0.0
  %618 = vmatprep.subr.mxu0 0.0
  %619 = vmatpush1.msra.mxu0 0.0
  %620 = vmatprep.subr.mxu0 0.0
  %621 = vmatpush1.msra.mxu0 0.0
  %622 = vmatprep.subr.mxu0 0.0
  %623 = vmatpush1.msra.mxu0 0.0
  %624 = vmatprep.subr.mxu0 0.0
  %625 = vmatpush1.msra.mxu0 0.0
  %626 = vmatprep.subr.mxu0 0.0
  %627 = vmatpush1.msra.mxu0 0.0
  %628 = vmatprep.subr.mxu0 0.0
  %629 = vmatpush1.msra.mxu0 0.0
  %630 = vmatprep.subr.mxu0 0.0
  %631 = vmatpush1.msra.mxu0 0.0
  %632 = vmatprep.subr.mxu0 0.0
  %633 = vmatpush1.msra.mxu0 0.0
  %634 = vmatprep.subr.mxu0 0.0
  %635 = vmatpush1.msra.mxu0 0.0
  %636 = vmatprep.mubr.f32.mxu0 0.0
  %637 = vmatmul.mubr.f32.gmra.mrb[0].mxu0 %v565
  %v638 = vpop.f32.mrb[0].mxu0
  %v639 = vadd.f32 %v570, %v638
  %v640 = vpop.f32.mrb[0].mxu0
  %641 = vdwg.mxu0
  %v642 = vlaneseq
  %v643 = vshrl.u32 %v642, 7
  %v644 = vtanh.pop %v639
  %v645 = vmul.f32 %v644, 2.0
  %v646 = vmax.f32 %v639, 0.0
  %v647 = vand.u32 2147483647, %v639
  %v648 = vsub.f32 0.0, %v647
  %v649 = vmul.f32 %v648, 1.442695
  %v650 = vpow.pop %v649
  %v651 = vadd.f32 %v650, 1.0
  %v652 = vlog2.pop %v651
  %v653 = vmul.f32 %v652, 0.6931472
  %v654 = vmul.f32 -0.5, %v650
  %v655 = vadd.f32 %v654, 1.0
  %v656 = vmul.f32 %v655, %v650
  %v657 = vand.u32 2147483647, %v650
  %vm658 = vcmp.lt.f32.partialorder %v657, 0.0004427343
  %v659 = vsel %vm658, %v656, %v653
  %v660 = vadd.f32 %v646, %v659
  %vm661 = vcmp.lt.s32.totalorder %v643, 2
  %v662 = vsel %vm661, %v645, %v660
  %663 = vst [vmem:[%s5] sm:$0xff] %v662
  // Predicated region
  $region22: #{policy_apply.1} parent=0 // pred_check
    _
  $region23: #{policy_apply.1} parent=0 // pred_check_branch
    %665 = sbr.rel (0) target = $region25
  $region24: #{policy_apply.1} parent=0 // pred_region
    _
  $region25: #{policy_apply.1} parent=0 // pred_fallthru
    _
  // Predicated region
  $region26: #{policy_apply.1} parent=0 // pred_check
    _
  $region27: #{policy_apply.1} parent=0 // pred_check_branch
    %667 = sbr.rel (0) target = $region29
  $region28: #{policy_apply.1} parent=0 // pred_region
    _
  $region29: #{policy_apply.1} parent=0 // pred_fallthru
    _

</llo_original>
